<compile_context>
chip_gen: v7x
topology: tpu7x:2x2x1
jax: 0.10.0
libtpu: 0.0.40
codegen_flags: <defaults>
</compile_context>

<pallas_src>
import functools

import jax
import jax.numpy as jnp
from jax.experimental import pallas as pl
from jax.experimental.pallas import tpu as pltpu

LANE_TILE = 128   # batch sits on lanes -> batch tiles are multiples of 128
SUBLANE = 8       # action rows padded to a sublane multiple


def _cdiv(a, b):
    return (a + b - 1) // b


def _round_up(n, m):
    return _cdiv(n, m) * m


def _choose_tile(batch, tile_b_max):
    """Pick a lane-aligned batch tile with bounded padding; >=2 tiles when the
    batch is big enough so v7x can shard the grid across both TensorCores."""
    bp_min = _round_up(batch, LANE_TILE)
    n_tiles = max(_cdiv(bp_min, tile_b_max), 1)
    if bp_min >= 2 * LANE_TILE:
        n_tiles = max(n_tiles, 2)
    tile_b = _round_up(_cdiv(bp_min, n_tiles), LANE_TILE)
    bp = tile_b * _cdiv(bp_min, tile_b)
    return tile_b, bp


def dqn_mlp_kernel(xt_ref, w1t_ref, b1t_ref, w2t_ref, b2t_ref, w3t_ref, b3t_ref,
                   *out_refs, num_actions, emit_q):
    # xt_ref: (state_dim, tile_b) -- batch along lanes, features along sublanes.
    xt = xt_ref[...]

    # Layer 1: relu(W1^T @ x^T + b1)   -> (24, tile_b)
    h1 = jnp.dot(w1t_ref[...], xt, preferred_element_type=jnp.float32)
    h1 = jnp.maximum(h1 + b1t_ref[...], 0.0)

    # Layer 2: relu(W2^T @ h1 + b2)    -> (24, tile_b)
    h2 = jnp.dot(w2t_ref[...], h1, preferred_element_type=jnp.float32)
    h2 = jnp.maximum(h2 + b2t_ref[...], 0.0)

    # Layer 3: W3^T @ h2 + b3          -> (act_pad, tile_b); rows >= num_actions are 0.
    q = jnp.dot(w3t_ref[...], h2, preferred_element_type=jnp.float32) + b3t_ref[...]

    if emit_q:
        qt_ref, a_ref = out_refs
        qt_ref[...] = q.astype(qt_ref.dtype)
    else:
        (a_ref,) = out_refs

    # Fused greedy action selection over the real action rows (sublane axis).
    row = jax.lax.broadcasted_iota(jnp.int32, q.shape, dimension=0)
    q_masked = jnp.where(row < num_actions, q, -jnp.inf)
    qmax = jnp.max(q_masked, axis=0, keepdims=True)
    idx = jnp.min(jnp.where(q_masked == qmax, row, q.shape[0]),
                  axis=0, keepdims=True)                    # first index of the max
    # NaN guard: a NaN row would otherwise yield the out-of-range sentinel.
    a_ref[...] = jnp.minimum(idx, num_actions - 1)


def dqn_forward(x, kernel_params, *, tile_b_max=4096, return_q=True):
    """x: (B, state_dim) f32.
    return_q=True  -> (q_values (B, num_actions) f32, greedy_actions (B,) i32)
    return_q=False -> greedy_actions (B,) i32 (acting path, no Q writeback)."""
    kp = kernel_params
    num_actions = kp["num_actions"]
    act_pad = kp["w3t"].shape[0]
    hidden = kp["w1t"].shape[0]
    B, state_dim = x.shape

    tile_b, Bp = _choose_tile(B, tile_b_max)
    grid = (Bp // tile_b,)

    # Transpose x once (tiny: state_dim*4 B/row); pad batch (lane axis) to Bp.
    xt = x.T
    if Bp != B:
        xt = jnp.pad(xt, ((0, 0), (0, Bp - B)))

    const = lambda a: pl.BlockSpec(a.shape, lambda i: (0, 0))  # VMEM-resident weights
    in_specs = [
        pl.BlockSpec((state_dim, tile_b), lambda i: (0, i)),
        const(kp["w1t"]), const(kp["b1t"]),
        const(kp["w2t"]), const(kp["b2t"]),
        const(kp["w3t"]), const(kp["b3t"]),
    ]

    out_shapes = []
    out_specs = []
    if return_q:
        out_shapes.append(jax.ShapeDtypeStruct((act_pad, Bp), jnp.float32))
        out_specs.append(pl.BlockSpec((act_pad, tile_b), lambda i: (0, i)))
    out_shapes.append(jax.ShapeDtypeStruct((1, Bp), jnp.int32))
    out_specs.append(pl.BlockSpec((1, tile_b), lambda i: (0, i)))

    weight_bytes = sum(int(kp[k].size) * 4
                       for k in ("w1t", "b1t", "w2t", "b2t", "w3t", "b3t"))
    bytes_accessed = (int(xt.size) * 4 + weight_bytes + Bp * 4
                      + (act_pad * Bp * 4 if return_q else 0))
    flops = 2 * Bp * (state_dim * hidden + hidden * hidden + hidden * act_pad)

    outs = pl.pallas_call(
        functools.partial(dqn_mlp_kernel, num_actions=num_actions,
                          emit_q=return_q),
        out_shape=tuple(out_shapes),
        grid=grid,
        in_specs=in_specs,
        out_specs=tuple(out_specs),
        compiler_params=pltpu.CompilerParams(
            dimension_semantics=("parallel",)),
        cost_estimate=pl.CostEstimate(flops=flops, transcendentals=0,
                                      bytes_accessed=bytes_accessed),
    )(xt, kp["w1t"], kp["b1t"], kp["w2t"], kp["b2t"], kp["w3t"], kp["b3t"])

    if return_q:
        qt_pad, a_pad = outs
        return qt_pad[:num_actions, :B].T, a_pad[0, :B]
    a_pad = outs[0] if isinstance(outs, (tuple, list)) else outs
    return a_pad[0, :B]


def init_params(key, state_dim, num_actions, hidden=24):
    """nn.Linear-style init (uniform +/- 1/sqrt(fan_in)), original orientation."""
    ks = jax.random.split(key, 6)

    def linear(kw, kb, fan_in, fan_out):
        bound = 1.0 / jnp.sqrt(jnp.float32(fan_in))
        w = jax.random.uniform(kw, (fan_in, fan_out), jnp.float32, -bound, bound)
        b = jax.random.uniform(kb, (fan_out,), jnp.float32, -bound, bound)
        return w, b

    w1, b1 = linear(ks[0], ks[1], state_dim, hidden)
    w2, b2 = linear(ks[2], ks[3], hidden, hidden)
    w3, b3 = linear(ks[4], ks[5], hidden, num_actions)
    return {"w1": w1, "b1": b1, "w2": w2, "b2": b2, "w3": w3, "b3": b3,
            "num_actions": num_actions}


def pack_params(p):
    """Kernel layout: transposed weights (out_features, in_features), column biases,
    final layer sublane-padded to a multiple of 8 action rows (padded rows are 0)."""
    na = p["num_actions"]
    act_pad = _round_up(na, SUBLANE)
    w3t = jnp.pad(p["w3"].T, ((0, act_pad - na), (0, 0)))
    b3t = jnp.pad(p["b3"].reshape(na, 1), ((0, act_pad - na), (0, 0)))
    return {
        "w1t": p["w1"].T, "b1t": p["b1"].reshape(-1, 1),
        "w2t": p["w2"].T, "b2t": p["b2"].reshape(-1, 1),
        "w3t": w3t, "b3t": b3t,
        "num_actions": na,
    }


def reference_forward(x, p):
    hp = jax.lax.Precision.HIGHEST
    h1 = jnp.maximum(jnp.dot(x, p["w1"], precision=hp) + p["b1"], 0.0)
    h2 = jnp.maximum(jnp.dot(h1, p["w2"], precision=hp) + p["b2"], 0.0)
    return jnp.dot(h2, p["w3"], precision=hp) + p["b3"]


# TODO(synk): ReplayMemory / remember() are host-side deque bookkeeping with no
# tensor compute; they have no Pallas equivalent and are intentionally omitted.

if __name__ == "__main__":
    key = jax.random.PRNGKey(0)
    k_params, k_x = jax.random.split(key)

    batch = 8
    state_dim = 16
    num_actions = 4

    params = init_params(k_params, state_dim, num_actions)
    kp = pack_params(params)
    x = jax.random.normal(k_x, (batch, state_dim), jnp.float32)

    q, actions = dqn_forward(x, kp, return_q=True)
    actions_only = dqn_forward(x, kp, return_q=False)   # acting path, no Q writeback
    q = jax.block_until_ready(q)
    actions = jax.block_until_ready(actions)
    actions_only = jax.block_until_ready(actions_only)

    q_ref = reference_forward(x, params)
    a_ref = jnp.argmax(q_ref, axis=-1).astype(jnp.int32)

    assert q.shape == (batch, num_actions)
    assert actions.shape == (batch,)
    assert actions_only.shape == (batch,)
    assert jnp.allclose(q, q_ref, atol=1e-5, rtol=1e-5), "Q mismatch vs reference"
    assert jnp.array_equal(actions, a_ref), "action mismatch vs reference"
    assert jnp.array_equal(actions_only, a_ref), "action-only path mismatch"

    print("KERNEL_OK")
</pallas_src>

<mosaic_0001>
module attributes {stable_mosaic.version = 11 : i64} {
  func.func @dqn_mlp_kernel(%arg0: i32, %arg1: memref<16x128xf32, #tpu.memory_space<vmem>>, %arg2: memref<24x16xf32, #tpu.memory_space<vmem>>, %arg3: memref<24x1xf32, #tpu.memory_space<vmem>>, %arg4: memref<24x24xf32, #tpu.memory_space<vmem>>, %arg5: memref<24x1xf32, #tpu.memory_space<vmem>>, %arg6: memref<8x24xf32, #tpu.memory_space<vmem>>, %arg7: memref<8x1xf32, #tpu.memory_space<vmem>>, %arg8: memref<8x128xf32, #tpu.memory_space<vmem>>, %arg9: memref<1x128xi32, #tpu.memory_space<vmem>>) attributes {dimension_semantics = [#tpu.dimension_semantics<parallel>], iteration_bounds = array<i64: 1>, scalar_prefetch = 0 : i64, scratch_operands = 0 : i64, tpu.core_type = #tpu.core_type<tc>, window_params = [{transform_indices = @transform_0, window_bounds = array<i64: 16, 128>}, {pipeline_mode = #tpu.pipeline_mode<synchronous>, transform_indices = @transform_1, window_bounds = array<i64: 24, 16>}, {pipeline_mode = #tpu.pipeline_mode<synchronous>, transform_indices = @transform_2, window_bounds = array<i64: 24, 1>}, {pipeline_mode = #tpu.pipeline_mode<synchronous>, transform_indices = @transform_3, window_bounds = array<i64: 24, 24>}, {pipeline_mode = #tpu.pipeline_mode<synchronous>, transform_indices = @transform_4, window_bounds = array<i64: 24, 1>}, {pipeline_mode = #tpu.pipeline_mode<synchronous>, transform_indices = @transform_5, window_bounds = array<i64: 8, 24>}, {pipeline_mode = #tpu.pipeline_mode<synchronous>, transform_indices = @transform_6, window_bounds = array<i64: 8, 1>}, {transform_indices = @transform_7, window_bounds = array<i64: 8, 128>}, {transform_indices = @transform_8, window_bounds = array<i64: 1, 128>}]} {
    %c0 = arith.constant 0 : index
    %c0_0 = arith.constant 0 : index
    %0 = vector.load %arg1[%c0, %c0_0] : memref<16x128xf32, #tpu.memory_space<vmem>>, vector<16x128xf32>
    %c0_1 = arith.constant 0 : index
    %c0_2 = arith.constant 0 : index
    %1 = vector.load %arg2[%c0_1, %c0_2] : memref<24x16xf32, #tpu.memory_space<vmem>>, vector<24x16xf32>
    %cst = arith.constant dense<0.000000e+00> : vector<24x128xf32>
    %2 = tpu.matmul %1, %0, %cst {dimension_numbers = #tpu.dot_dimension_numbers<[1], [0], [0], [1], [0, 0, 1, 1], [], []>} : vector<24x16xf32>, vector<16x128xf32>, vector<24x128xf32> -> vector<24x128xf32>
    %c0_3 = arith.constant 0 : index
    %c0_4 = arith.constant 0 : index
    %3 = vector.load %arg3[%c0_3, %c0_4] : memref<24x1xf32, #tpu.memory_space<vmem>>, vector<24x1xf32>
    %4 = vector.broadcast %3 : vector<24x1xf32> to vector<24x128xf32>
    %5 = arith.addf %2, %4 : vector<24x128xf32>
    %cst_5 = arith.constant 0.000000e+00 : f32
    %6 = vector.broadcast %cst_5 : f32 to vector<24x128xf32>
    %7 = arith.maximumf %5, %6 : vector<24x128xf32>
    %c0_6 = arith.constant 0 : index
    %c0_7 = arith.constant 0 : index
    %8 = vector.load %arg4[%c0_6, %c0_7] : memref<24x24xf32, #tpu.memory_space<vmem>>, vector<24x24xf32>
    %cst_8 = arith.constant dense<0.000000e+00> : vector<24x128xf32>
    %9 = tpu.matmul %8, %7, %cst_8 {dimension_numbers = #tpu.dot_dimension_numbers<[1], [0], [0], [1], [0, 0, 1, 1], [], []>} : vector<24x24xf32>, vector<24x128xf32>, vector<24x128xf32> -> vector<24x128xf32>
    %c0_9 = arith.constant 0 : index
    %c0_10 = arith.constant 0 : index
    %10 = vector.load %arg5[%c0_9, %c0_10] : memref<24x1xf32, #tpu.memory_space<vmem>>, vector<24x1xf32>
    %11 = vector.broadcast %10 : vector<24x1xf32> to vector<24x128xf32>
    %12 = arith.addf %9, %11 : vector<24x128xf32>
    %cst_11 = arith.constant 0.000000e+00 : f32
    %13 = vector.broadcast %cst_11 : f32 to vector<24x128xf32>
    %14 = arith.maximumf %12, %13 : vector<24x128xf32>
    %c0_12 = arith.constant 0 : index
    %c0_13 = arith.constant 0 : index
    %15 = vector.load %arg6[%c0_12, %c0_13] : memref<8x24xf32, #tpu.memory_space<vmem>>, vector<8x24xf32>
    %cst_14 = arith.constant dense<0.000000e+00> : vector<8x128xf32>
    %16 = tpu.matmul %15, %14, %cst_14 {dimension_numbers = #tpu.dot_dimension_numbers<[1], [0], [0], [1], [0, 0, 1, 1], [], []>} : vector<8x24xf32>, vector<24x128xf32>, vector<8x128xf32> -> vector<8x128xf32>
    %c0_15 = arith.constant 0 : index
    %c0_16 = arith.constant 0 : index
    %17 = vector.load %arg7[%c0_15, %c0_16] : memref<8x1xf32, #tpu.memory_space<vmem>>, vector<8x1xf32>
    %18 = vector.broadcast %17 : vector<8x1xf32> to vector<8x128xf32>
    %19 = arith.addf %16, %18 : vector<8x128xf32>
    %c0_17 = arith.constant 0 : index
    %c0_18 = arith.constant 0 : index
    %20 = vector.load %arg8[%c0_17, %c0_18] : memref<8x128xf32, #tpu.memory_space<vmem>>, vector<8x128xf32>
    tpu.vector_store %arg8[%c0_17, %c0_18], %19 {strides = array<i32>} : memref<8x128xf32, #tpu.memory_space<vmem>>, vector<8x128xf32>,
    %21 = tpu.iota {dimensions = array<i32: 0>} : vector<8x128xi32>
    %c4_i32 = arith.constant 4 : i32
    %22 = vector.broadcast %c4_i32 : i32 to vector<8x128xi32>
    %23 = arith.cmpi slt, %21, %22 : vector<8x128xi32>
    %cst_19 = arith.constant 0xFF800000 : f32
    %24 = vector.broadcast %cst_19 : f32 to vector<8x128xf32>
    %25 = arith.select %23, %19, %24 : vector<8x128xi1>, vector<8x128xf32>
    %cst_20 = arith.constant dense<0xFF800000> : vector<128xf32>
    %26 = vector.multi_reduction <maximumf>, %25, %cst_20 [0] : vector<8x128xf32> to vector<128xf32>
    %27 = vector.shape_cast %26 : vector<128xf32> to vector<1x128xf32>
    %28 = vector.broadcast %27 : vector<1x128xf32> to vector<8x128xf32>
    %29 = arith.cmpf oeq, %25, %28 : vector<8x128xf32>
    %c8_i32 = arith.constant 8 : i32
    %30 = vector.broadcast %c8_i32 : i32 to vector<8x128xi32>
    %31 = arith.select %29, %21, %30 : vector<8x128xi1>, vector<8x128xi32>
    %cst_21 = arith.constant dense<2147483647> : vector<128xi32>
    %32 = vector.multi_reduction <minsi>, %31, %cst_21 [0] : vector<8x128xi32> to vector<128xi32>
    %33 = vector.shape_cast %32 : vector<128xi32> to vector<1x128xi32>
    %c3_i32 = arith.constant 3 : i32
    %34 = vector.broadcast %c3_i32 : i32 to vector<1x128xi32>
    %35 = arith.minsi %33, %34 : vector<1x128xi32>
    %c0_22 = arith.constant 0 : index
    %c0_23 = arith.constant 0 : index
    %36 = vector.load %arg9[%c0_22, %c0_23] : memref<1x128xi32, #tpu.memory_space<vmem>>, vector<1x128xi32>
    tpu.vector_store %arg9[%c0_22, %c0_23], %35 {strides = array<i32>} : memref<1x128xi32, #tpu.memory_space<vmem>>, vector<1x128xi32>,
    return
  }
  func.func @transform_0(%arg0: i32) -> (i32, i32) {
    %c0_i32 = arith.constant 0 : i32
    %c0_i32_0 = arith.constant 0 : i32
    return %c0_i32, %arg0 : i32, i32
  }
  func.func @transform_1(%arg0: i32) -> (i32, i32) {
    %c0_i32 = arith.constant 0 : i32
    %c0_i32_0 = arith.constant 0 : i32
    %c0_i32_1 = arith.constant 0 : i32
    return %c0_i32, %c0_i32_0 : i32, i32
  }
  func.func @transform_2(%arg0: i32) -> (i32, i32) {
    %c0_i32 = arith.constant 0 : i32
    %c0_i32_0 = arith.constant 0 : i32
    %c0_i32_1 = arith.constant 0 : i32
    return %c0_i32, %c0_i32_0 : i32, i32
  }
  func.func @transform_3(%arg0: i32) -> (i32, i32) {
    %c0_i32 = arith.constant 0 : i32
    %c0_i32_0 = arith.constant 0 : i32
    %c0_i32_1 = arith.constant 0 : i32
    return %c0_i32, %c0_i32_0 : i32, i32
  }
  func.func @transform_4(%arg0: i32) -> (i32, i32) {
    %c0_i32 = arith.constant 0 : i32
    %c0_i32_0 = arith.constant 0 : i32
    %c0_i32_1 = arith.constant 0 : i32
    return %c0_i32, %c0_i32_0 : i32, i32
  }
  func.func @transform_5(%arg0: i32) -> (i32, i32) {
    %c0_i32 = arith.constant 0 : i32
    %c0_i32_0 = arith.constant 0 : i32
    %c0_i32_1 = arith.constant 0 : i32
    return %c0_i32, %c0_i32_0 : i32, i32
  }
  func.func @transform_6(%arg0: i32) -> (i32, i32) {
    %c0_i32 = arith.constant 0 : i32
    %c0_i32_0 = arith.constant 0 : i32
    %c0_i32_1 = arith.constant 0 : i32
    return %c0_i32, %c0_i32_0 : i32, i32
  }
  func.func @transform_7(%arg0: i32) -> (i32, i32) {
    %c0_i32 = arith.constant 0 : i32
    %c0_i32_0 = arith.constant 0 : i32
    return %c0_i32, %arg0 : i32, i32
  }
  func.func @transform_8(%arg0: i32) -> (i32, i32) {
    %c0_i32 = arith.constant 0 : i32
    %c0_i32_0 = arith.constant 0 : i32
    return %c0_i32, %arg0 : i32, i32
  }
}

</mosaic_0001>

<llo_original>
// kernel: tpu_custom_call.1
$region0: #{tpu_custom_call.1}
  #allocation0 [shape = 'u32[]', space=smem, size = 0x4, offset = 0x4, fixed_abs, tag = 'smem constant byte address 0x4 - core index']
  #allocation1 [shape = 'u32[144,128]{1,0:T(1,128)}', space=vmem, size = 0x12000, scoped, tag = 'internal scratch']
  %s0 = inlined_call_operand.vmem [shape: f32[16,128], index: 0, kind: input, shape index: {}]
  %s1 = inlined_call_operand.vmem [shape: f32[24,16], index: 1, kind: input, shape index: {}]
  %s2 = inlined_call_operand.vmem [shape: f32[24,1], index: 2, kind: input, shape index: {}]
  %s3 = inlined_call_operand.vmem [shape: f32[24,24], index: 3, kind: input, shape index: {}]
  %s4 = inlined_call_operand.vmem [shape: f32[24,1], index: 4, kind: input, shape index: {}]
  %s5 = inlined_call_operand.vmem [shape: f32[8,24], index: 5, kind: input, shape index: {}]
  %s6 = inlined_call_operand.vmem [shape: f32[8,1], index: 6, kind: input, shape index: {}]
  %s7 = inlined_call_operand.hbm [shape: f32[8,128], index: 7, kind: output, shape index: {0}]
  %s8 = inlined_call_operand.hbm [shape: s32[1,128], index: 8, kind: output, shape index: {1}]
  %9 = xla_tuple %s7, %s8
  %s10 = sld [smem:[#allocation0]]
  $region46: #{tpu_custom_call.1} parent=0
    _
  %s12 = ssub.s32 1, %s10
  %s13 = scalar_select 0, %s12, %s10
  $region1: #{tpu_custom_call.1} parent=0
    #allocation2 [shape = 'u8[4096]{0}', space=vmem, size = 0x1000, scoped, tag = 'output window, operand 0, single buffered']
    #allocation3 [shape = 's32[1]{0}', space=sflag, size = 0x4, scoped, tag = 'scoped memory for tpu_custom_call.1']
    #allocation4 [shape = 'u8[512]{0}', space=vmem, size = 0x400, scoped, tag = 'output window, operand 1, single buffered']
    #allocation5 [shape = 's32[1]{0}', space=sflag, size = 0x4, scoped, tag = 'scoped memory for tpu_custom_call.1']
    %14 = vsyncpa [#allocation3], 0
    %15 = vsyncpa [#allocation5], 0
    // Predicated region
    $region2: #{tpu_custom_call.1} parent=1 // pred_check
      _
    $region3: #{tpu_custom_call.1} parent=1 // pred_check_branch
      %17 = sbr.rel (0) target = $region5
    $region4: #{tpu_custom_call.1} parent=1 // pred_region
      _
    $region5: #{tpu_custom_call.1} parent=1 // pred_fallthru
      _
    // Predicated region
    $region6: #{tpu_custom_call.1} parent=1 // pred_check
      _
    $region7: #{tpu_custom_call.1} parent=1 // pred_check_branch
      %19 = sbr.rel (0) target = $region9
    $region8: #{tpu_custom_call.1} parent=1 // pred_region
      _
    $region9: #{tpu_custom_call.1} parent=1 // pred_fallthru
      _
    // Predicated region
    $region10: #{tpu_custom_call.1} parent=1 // pred_check
      _
    $region11: #{tpu_custom_call.1} parent=1 // pred_check_branch
      %21 = sbr.rel (0) target = $region13
    $region12: #{tpu_custom_call.1} parent=1 // pred_region
      _
    $region13: #{tpu_custom_call.1} parent=1 // pred_fallthru
      _
    // Predicated region
    $region14: #{tpu_custom_call.1} parent=1 // pred_check
      _
    $region15: #{tpu_custom_call.1} parent=1 // pred_check_branch
      %23 = sbr.rel (0) target = $region17
    $region16: #{tpu_custom_call.1} parent=1 // pred_region
      _
    $region17: #{tpu_custom_call.1} parent=1 // pred_fallthru
      _
    // Predicated region
    $region18: #{tpu_custom_call.1} parent=1 // pred_check
      _
    $region19: #{tpu_custom_call.1} parent=1 // pred_check_branch
      %25 = sbr.rel (0) target = $region21
    $region20: #{tpu_custom_call.1} parent=1 // pred_region
      _
    $region21: #{tpu_custom_call.1} parent=1 // pred_fallthru
      _
    // Predicated region
    $region22: #{tpu_custom_call.1} parent=1 // pred_check
      _
    $region23: #{tpu_custom_call.1} parent=1 // pred_check_branch
      %27 = sbr.rel (0) target = $region25
    $region24: #{tpu_custom_call.1} parent=1 // pred_region
      _
    $region25: #{tpu_custom_call.1} parent=1 // pred_fallthru
      _
    // Predicated region
    $region26: #{tpu_custom_call.1} parent=1 // pred_check
      _
    $region27: #{tpu_custom_call.1} parent=1 // pred_check_branch
      %29 = sbr.rel (0) target = $region29
    $region28: #{tpu_custom_call.1} parent=1 // pred_region
      _
    $region29: #{tpu_custom_call.1} parent=1 // pred_fallthru
      _
    %v30 = vld [vmem:[%s0] sm:$0xff]
    %v31 = vld [vmem:[%s0 + $0x8] sm:$0xff]
    %v32 = vld [vmem:[%s1] sm:$0xff]
    %v33 = vld [vmem:[%s1 + $0x8] sm:$0xff]
    %v34 = vld [vmem:[%s1 + $0x10] sm:$0xff]
    %v35 = vld [vmem:[%s2] sm:$0xff]
    %v36 = vld [vmem:[%s2 + $0x8] sm:$0xff]
    %v37 = vld [vmem:[%s2 + $0x10] sm:$0xff]
    %39 = vset.pattern.permute.xlu0 0
    %40 = vperm.xlu0 %39, %v35
    %v41 = vpop.permute.xlu0 %40
    %44 = vset.pattern.permute.xlu0 0
    %45 = vperm.xlu0 %44, %v36
    %v46 = vpop.permute.xlu0 %45
    %49 = vset.pattern.permute.xlu0 0
    %50 = vperm.xlu0 %49, %v37
    %v51 = vpop.permute.xlu0 %50
    %vm53 = vcmask 130048
    %v55 = vsel %vm53, %v32, 0
    %v58 = vsel %vm53, %v33, 0
    %v61 = vsel %vm53, %v34, 0
    %63 = vmatprep.subr.mxu0 0.0
    %64 = vmatpush1.msra.mxu0 %v30
    %65 = vmatprep.subr.mxu0 0.0
    %66 = vmatpush1.msra.mxu0 %v31
    %67 = vmatprep.subr.mxu0 0.0
    %68 = vmatpush1.msra.mxu0 0.0
    %69 = vmatprep.subr.mxu0 0.0
    %70 = vmatpush1.msra.mxu0 0.0
    %71 = vmatprep.subr.mxu0 0.0
    %72 = vmatpush1.msra.mxu0 0.0
    %73 = vmatprep.subr.mxu0 0.0
    %74 = vmatpush1.msra.mxu0 0.0
    %75 = vmatprep.subr.mxu0 0.0
    %76 = vmatpush1.msra.mxu0 0.0
    %77 = vmatprep.subr.mxu0 0.0
    %78 = vmatpush1.msra.mxu0 0.0
    %79 = vmatprep.subr.mxu0 0.0
    %80 = vmatpush1.msra.mxu0 0.0
    %81 = vmatprep.subr.mxu0 0.0
    %82 = vmatpush1.msra.mxu0 0.0
    %83 = vmatprep.subr.mxu0 0.0
    %84 = vmatpush1.msra.mxu0 0.0
    %85 = vmatprep.subr.mxu0 0.0
    %86 = vmatpush1.msra.mxu0 0.0
    %87 = vmatprep.subr.mxu0 0.0
    %88 = vmatpush1.msra.mxu0 0.0
    %89 = vmatprep.subr.mxu0 0.0
    %90 = vmatpush1.msra.mxu0 0.0
    %91 = vmatprep.subr.mxu0 0.0
    %92 = vmatpush1.msra.mxu0 0.0
    %93 = vmatprep.subr.mxu0 0.0
    %94 = vmatpush1.msra.mxu0 0.0
    %95 = vmatprep.subr.mxu0 0.0
    %96 = vmatpush1.msra.mxu0 0.0
    %97 = vmatprep.subr.mxu0 0.0
    %98 = vmatpush1.msra.mxu0 0.0
    %99 = vmatprep.subr.mxu0 0.0
    %100 = vmatpush1.msra.mxu0 0.0
    %101 = vmatprep.subr.mxu0 0.0
    %102 = vmatpush1.msra.mxu0 0.0
    %103 = vmatprep.subr.mxu0 0.0
    %104 = vmatpush1.msra.mxu0 0.0
    %105 = vmatprep.subr.mxu0 0.0
    %106 = vmatpush1.msra.mxu0 0.0
    %107 = vmatprep.subr.mxu0 0.0
    %108 = vmatpush1.msra.mxu0 0.0
    %109 = vmatprep.subr.mxu0 0.0
    %110 = vmatpush1.msra.mxu0 0.0
    %111 = vmatprep.subr.mxu0 0.0
    %112 = vmatpush1.msra.mxu0 0.0
    %113 = vmatprep.subr.mxu0 0.0
    %114 = vmatpush1.msra.mxu0 0.0
    %115 = vmatprep.subr.mxu0 0.0
    %116 = vmatpush1.msra.mxu0 0.0
    %117 = vmatprep.subr.mxu0 0.0
    %118 = vmatpush1.msra.mxu0 0.0
    %119 = vmatprep.subr.mxu0 0.0
    %120 = vmatpush1.msra.mxu0 0.0
    %121 = vmatprep.subr.mxu0 0.0
    %122 = vmatpush1.msra.mxu0 0.0
    %123 = vmatprep.subr.mxu0 0.0
    %124 = vmatpush1.msra.mxu0 0.0
    %125 = vmatprep.subr.mxu0 0.0
    %126 = vmatpush1.msra.mxu0 0.0
    %127 = vmatprep.mubr.f32.mxu0 0.0
    %128 = vmatmul.mubr.f32.gmra.mrb[0].mxu0 %v55
    %v129 = vpop.f32.mrb[0].mxu0
    %v130 = vadd.f32 %v41, %v129
    %v131 = vpop.f32.mrb[0].mxu0
    %132 = vmatprep.mubr.f32.mxu0 0.0
    %133 = vmatmul.mubr.f32.gmra.mrb[0].mxu0 %v58
    %v134 = vpop.f32.mrb[0].mxu0
    %v135 = vadd.f32 %v46, %v134
    %v136 = vpop.f32.mrb[0].mxu0
    %137 = vmatprep.mubr.f32.mxu0 0.0
    %138 = vmatmul.mubr.f32.gmra.mrb[0].mxu0 %v61
    %v139 = vpop.f32.mrb[0].mxu0
    %v140 = vadd.f32 %v51, %v139
    %v141 = vpop.f32.mrb[0].mxu0
    %142 = vdwg.mxu0
    %v143 = vmax.f32 %v130, 0.0
    %v144 = vmax.f32 %v135, 0.0
    %v145 = vmax.f32 %v140, 0.0
    %v146 = vld [vmem:[%s3] sm:$0xff]
    %v147 = vld [vmem:[%s3 + $0x8] sm:$0xff]
    %v148 = vld [vmem:[%s3 + $0x10] sm:$0xff]
    %v149 = vld [vmem:[%s4] sm:$0xff]
    %v150 = vld [vmem:[%s4 + $0x8] sm:$0xff]
    %v151 = vld [vmem:[%s4 + $0x10] sm:$0xff]
    %153 = vset.pattern.permute.xlu0 0
    %154 = vperm.xlu0 %153, %v149
    %v155 = vpop.permute.xlu0 %154
    %158 = vset.pattern.permute.xlu0 0
    %159 = vperm.xlu0 %158, %v150
    %v160 = vpop.permute.xlu0 %159
    %163 = vset.pattern.permute.xlu0 0
    %164 = vperm.xlu0 %163, %v151
    %v165 = vpop.permute.xlu0 %164
    %vm167 = vcmask 195584
    %v169 = vsel %vm167, %v146, 0
    %v172 = vsel %vm167, %v147, 0
    %v175 = vsel %vm167, %v148, 0
    %177 = vmatprep.subr.mxu0 0.0
    %178 = vmatpush1.msra.mxu0 %v143
    %179 = vmatprep.subr.mxu0 0.0
    %180 = vmatpush1.msra.mxu0 %v144
    %181 = vmatprep.subr.mxu0 0.0
    %182 = vmatpush1.msra.mxu0 %v145
    %183 = vmatprep.subr.mxu0 0.0
    %184 = vmatpush1.msra.mxu0 0.0
    %185 = vmatprep.subr.mxu0 0.0
    %186 = vmatpush1.msra.mxu0 0.0
    %187 = vmatprep.subr.mxu0 0.0
    %188 = vmatpush1.msra.mxu0 0.0
    %189 = vmatprep.subr.mxu0 0.0
    %190 = vmatpush1.msra.mxu0 0.0
    %191 = vmatprep.subr.mxu0 0.0
    %192 = vmatpush1.msra.mxu0 0.0
    %193 = vmatprep.subr.mxu0 0.0
    %194 = vmatpush1.msra.mxu0 0.0
    %195 = vmatprep.subr.mxu0 0.0
    %196 = vmatpush1.msra.mxu0 0.0
    %197 = vmatprep.subr.mxu0 0.0
    %198 = vmatpush1.msra.mxu0 0.0
    %199 = vmatprep.subr.mxu0 0.0
    %200 = vmatpush1.msra.mxu0 0.0
    %201 = vmatprep.subr.mxu0 0.0
    %202 = vmatpush1.msra.mxu0 0.0
    %203 = vmatprep.subr.mxu0 0.0
    %204 = vmatpush1.msra.mxu0 0.0
    %205 = vmatprep.subr.mxu0 0.0
    %206 = vmatpush1.msra.mxu0 0.0
    %207 = vmatprep.subr.mxu0 0.0
    %208 = vmatpush1.msra.mxu0 0.0
    %209 = vmatprep.subr.mxu0 0.0
    %210 = vmatpush1.msra.mxu0 0.0
    %211 = vmatprep.subr.mxu0 0.0
    %212 = vmatpush1.msra.mxu0 0.0
    %213 = vmatprep.subr.mxu0 0.0
    %214 = vmatpush1.msra.mxu0 0.0
    %215 = vmatprep.subr.mxu0 0.0
    %216 = vmatpush1.msra.mxu0 0.0
    %217 = vmatprep.subr.mxu0 0.0
    %218 = vmatpush1.msra.mxu0 0.0
    %219 = vmatprep.subr.mxu0 0.0
    %220 = vmatpush1.msra.mxu0 0.0
    %221 = vmatprep.subr.mxu0 0.0
    %222 = vmatpush1.msra.mxu0 0.0
    %223 = vmatprep.subr.mxu0 0.0
    %224 = vmatpush1.msra.mxu0 0.0
    %225 = vmatprep.subr.mxu0 0.0
    %226 = vmatpush1.msra.mxu0 0.0
    %227 = vmatprep.subr.mxu0 0.0
    %228 = vmatpush1.msra.mxu0 0.0
    %229 = vmatprep.subr.mxu0 0.0
    %230 = vmatpush1.msra.mxu0 0.0
    %231 = vmatprep.subr.mxu0 0.0
    %232 = vmatpush1.msra.mxu0 0.0
    %233 = vmatprep.subr.mxu0 0.0
    %234 = vmatpush1.msra.mxu0 0.0
    %235 = vmatprep.subr.mxu0 0.0
    %236 = vmatpush1.msra.mxu0 0.0
    %237 = vmatprep.subr.mxu0 0.0
    %238 = vmatpush1.msra.mxu0 0.0
    %239 = vmatprep.subr.mxu0 0.0
    %240 = vmatpush1.msra.mxu0 0.0
    %241 = vmatprep.mubr.f32.mxu0 0.0
    %242 = vmatmul.mubr.f32.gmra.mrb[0].mxu0 %v169
    %v243 = vpop.f32.mrb[0].mxu0
    %v244 = vadd.f32 %v155, %v243
    %v245 = vpop.f32.mrb[0].mxu0
    %246 = vmatprep.mubr.f32.mxu0 0.0
    %247 = vmatmul.mubr.f32.gmra.mrb[0].mxu0 %v172
    %v248 = vpop.f32.mrb[0].mxu0
    %v249 = vadd.f32 %v160, %v248
    %v250 = vpop.f32.mrb[0].mxu0
    %251 = vmatprep.mubr.f32.mxu0 0.0
    %252 = vmatmul.mubr.f32.gmra.mrb[0].mxu0 %v175
    %v253 = vpop.f32.mrb[0].mxu0
    %v254 = vadd.f32 %v165, %v253
    %v255 = vpop.f32.mrb[0].mxu0
    %256 = vdwg.mxu0
    %v257 = vmax.f32 %v244, 0.0
    %v258 = vmax.f32 %v249, 0.0
    %v259 = vmax.f32 %v254, 0.0
    %v260 = vld [vmem:[%s5] sm:$0xff]
    %v261 = vld [vmem:[%s6] sm:$0xff]
    %263 = vset.pattern.permute.xlu0 0
    %264 = vperm.xlu0 %263, %v261
    %v265 = vpop.permute.xlu0 %264
    %v268 = vsel %vm167, %v260, 0
    %270 = vmatprep.subr.mxu0 0.0
    %271 = vmatpush1.msra.mxu0 %v257
    %272 = vmatprep.subr.mxu0 0.0
    %273 = vmatpush1.msra.mxu0 %v258
    %274 = vmatprep.subr.mxu0 0.0
    %275 = vmatpush1.msra.mxu0 %v259
    %276 = vmatprep.subr.mxu0 0.0
    %277 = vmatpush1.msra.mxu0 0.0
    %278 = vmatprep.subr.mxu0 0.0
    %279 = vmatpush1.msra.mxu0 0.0
    %280 = vmatprep.subr.mxu0 0.0
    %281 = vmatpush1.msra.mxu0 0.0
    %282 = vmatprep.subr.mxu0 0.0
    %283 = vmatpush1.msra.mxu0 0.0
    %284 = vmatprep.subr.mxu0 0.0
    %285 = vmatpush1.msra.mxu0 0.0
    %286 = vmatprep.subr.mxu0 0.0
    %287 = vmatpush1.msra.mxu0 0.0
    %288 = vmatprep.subr.mxu0 0.0
    %289 = vmatpush1.msra.mxu0 0.0
    %290 = vmatprep.subr.mxu0 0.0
    %291 = vmatpush1.msra.mxu0 0.0
    %292 = vmatprep.subr.mxu0 0.0
    %293 = vmatpush1.msra.mxu0 0.0
    %294 = vmatprep.subr.mxu0 0.0
    %295 = vmatpush1.msra.mxu0 0.0
    %296 = vmatprep.subr.mxu0 0.0
    %297 = vmatpush1.msra.mxu0 0.0
    %298 = vmatprep.subr.mxu0 0.0
    %299 = vmatpush1.msra.mxu0 0.0
    %300 = vmatprep.subr.mxu0 0.0
    %301 = vmatpush1.msra.mxu0 0.0
    %302 = vmatprep.subr.mxu0 0.0
    %303 = vmatpush1.msra.mxu0 0.0
    %304 = vmatprep.subr.mxu0 0.0
    %305 = vmatpush1.msra.mxu0 0.0
    %306 = vmatprep.subr.mxu0 0.0
    %307 = vmatpush1.msra.mxu0 0.0
    %308 = vmatprep.subr.mxu0 0.0
    %309 = vmatpush1.msra.mxu0 0.0
    %310 = vmatprep.subr.mxu0 0.0
    %311 = vmatpush1.msra.mxu0 0.0
    %312 = vmatprep.subr.mxu0 0.0
    %313 = vmatpush1.msra.mxu0 0.0
    %314 = vmatprep.subr.mxu0 0.0
    %315 = vmatpush1.msra.mxu0 0.0
    %316 = vmatprep.subr.mxu0 0.0
    %317 = vmatpush1.msra.mxu0 0.0
    %318 = vmatprep.subr.mxu0 0.0
    %319 = vmatpush1.msra.mxu0 0.0
    %320 = vmatprep.subr.mxu0 0.0
    %321 = vmatpush1.msra.mxu0 0.0
    %322 = vmatprep.subr.mxu0 0.0
    %323 = vmatpush1.msra.mxu0 0.0
    %324 = vmatprep.subr.mxu0 0.0
    %325 = vmatpush1.msra.mxu0 0.0
    %326 = vmatprep.subr.mxu0 0.0
    %327 = vmatpush1.msra.mxu0 0.0
    %328 = vmatprep.subr.mxu0 0.0
    %329 = vmatpush1.msra.mxu0 0.0
    %330 = vmatprep.subr.mxu0 0.0
    %331 = vmatpush1.msra.mxu0 0.0
    %332 = vmatprep.subr.mxu0 0.0
    %333 = vmatpush1.msra.mxu0 0.0
    %334 = vmatprep.mubr.f32.mxu0 0.0
    %335 = vmatmul.mubr.f32.gmra.mrb[0].mxu0 %v268
    %v336 = vpop.f32.mrb[0].mxu0
    %v337 = vadd.f32 %v265, %v336
    %v338 = vpop.f32.mrb[0].mxu0
    %339 = vdwg.mxu0
    %340 = vst [vmem:[#allocation2] sm:$0xff] %v337
    %v341 = vlaneseq
    %v342 = vshrl.u32 %v341, 7
    %vm343 = vcmp.lt.s32.totalorder %v342, 4
    %v344 = vsel %vm343, %v337, -inf
    %v345 = vrot.slane %v344, 4
    %v346 = vmax.f32 %v344, %v345
    %v347 = vrot.slane %v346, 2
    %v348 = vmax.f32 %v346, %v347
    %v349 = vrot.slane %v348, 1
    %v350 = vmax.f32 %v348, %v349
    %vm351 = vcmp.eq.f32.partialorder %v344, %v350
    %v352 = vsel %vm351, %v342, 8
    %v353 = vrot.slane %v352, 4
    %vm354 = vcmp.lt.s32.totalorder %v352, %v353
    %v355 = vsel %vm354, %v352, %v353
    %v356 = vrot.slane %v355, 2
    %vm357 = vcmp.lt.s32.totalorder %v355, %v356
    %v358 = vsel %vm357, %v355, %v356
    %v359 = vrot.slane %v358, 1
    %vm360 = vcmp.lt.s32.totalorder %v358, %v359
    %v361 = vsel %vm360, %v358, %v359
    %vm362 = vcmp.lt.s32.totalorder %v361, 3
    %v363 = vsel %vm362, %v361, 3
    %364 = vst [vmem:[#allocation4] sm:$0x1] %v363
    // Predicated region
    $region30: #{tpu_custom_call.1} parent=1 // pred_check
      _
    $region31: #{tpu_custom_call.1} parent=1 // pred_check_branch
      %366 = sbr.rel (0) target = $region33
    $region32: #{tpu_custom_call.1} parent=1 // pred_region
      %s368 = ssub.s32 128, 128
      %369 = vsyncadd [#allocation3], %s368
      %s371 = sshll.u32 [#allocation2], 4
      %s372 = int_to_ptr.vmem [resolvable:$true] %s371
      %374 = dma.vmem_to_hbm [thread:$0]  %s372, 128, %s7, [#allocation3]
    $region33: #{tpu_custom_call.1} parent=1 // pred_fallthru
      _
    // Predicated region
    $region34: #{tpu_custom_call.1} parent=1 // pred_check
      _
    $region35: #{tpu_custom_call.1} parent=1 // pred_check_branch
      %376 = sbr.rel (0) target = $region37
    $region36: #{tpu_custom_call.1} parent=1 // pred_region
      %s378 = ssub.s32 16, 16
      %379 = vsyncadd [#allocation5], %s378
      %s381 = sshll.u32 [#allocation4], 4
      %s382 = int_to_ptr.vmem [resolvable:$true] %s381
      %384 = dma.vmem_to_hbm [thread:$0]  %s382, 16, %s8, [#allocation5]
    $region37: #{tpu_custom_call.1} parent=1 // pred_fallthru
      _
    // Predicated region
    $region38: #{tpu_custom_call.1} parent=1 // pred_check
      _
    $region39: #{tpu_custom_call.1} parent=1 // pred_check_branch
      %386 = sbr.rel (0) target = $region41
    $region40: #{tpu_custom_call.1} parent=1 // pred_region
      %387 = dma.done [#allocation3], 128
    $region41: #{tpu_custom_call.1} parent=1 // pred_fallthru
      _
    // Predicated region
    $region42: #{tpu_custom_call.1} parent=1 // pred_check
      _
    $region43: #{tpu_custom_call.1} parent=1 // pred_check_branch
      %389 = sbr.rel (0) target = $region45
    $region44: #{tpu_custom_call.1} parent=1 // pred_region
      %390 = dma.done [#allocation5], 16
    $region45: #{tpu_custom_call.1} parent=1 // pred_fallthru
      _
    %391 = vsyncpa [#allocation3], 1
    %392 = vsyncpa [#allocation5], 1

</llo_original>
